<compile_context>
chip_gen: v7x
topology: tpu7x:2x2x1
jax: 0.10.0
libtpu: 0.0.40
codegen_flags: <defaults>
</compile_context>

<pallas_src>
import jax
import jax.numpy as jnp
from jax.experimental import pallas as pl
from jax.experimental.pallas import tpu as pltpu

_LANE = 128
_TARGET_TILE_BYTES = 2 * 1024 * 1024  # ~2 MiB/tile -> ~8 MiB with double buffering


def _identity_kernel(x_ref, o_ref):
    # Pure VMEM pass-through: one vld + one unmasked vst per tile.
    o_ref[...] = x_ref[...]


def _pick_width(n_elem: int):
    # Widest lane-dense last dim (multiple of 128) dividing n_elem exactly,
    # so no padding or tail handling is ever needed.
    for w in (4096, 2048, 1024, 512, 256, 128):
        if n_elem % w == 0:
            return w
    return None


def no_preprocessing(x: jax.Array) -> jax.Array:
    """Pallas implementation of NoPreprocessing.forward: returns x unchanged."""
    n_elem = x.size
    if n_elem == 0:
        return x

    width = _pick_width(n_elem)
    if width is None:
        # Element count not a multiple of 128: padding + slicing would add two
        # full-array HBM copies, strictly worse than the identity itself.
        return x

    rows = n_elem // width
    itemsize = jnp.dtype(x.dtype).itemsize
    # Native sublane packing: 8 rows (4-byte), 16 (2-byte), 32 (1-byte dtypes).
    sublane = max(8, 32 // max(itemsize, 1))

    if rows < sublane:
        # Block equals the full array dims -> exempt from the (8, 128) rule.
        tile_rows = rows
    else:
        desired = _TARGET_TILE_BYTES // (width * itemsize)
        desired = max(sublane, (desired // sublane) * sublane)
        tile_rows = min(desired, (rows // sublane) * sublane)

    grid = (pl.cdiv(rows, tile_rows),)

    x2d = jnp.reshape(x, (rows, width))
    out2d = pl.pallas_call(
        _identity_kernel,
        out_shape=jax.ShapeDtypeStruct((rows, width), x2d.dtype),
        grid=grid,
        in_specs=[pl.BlockSpec((tile_rows, width), lambda i: (i, 0))],
        out_specs=pl.BlockSpec((tile_rows, width), lambda i: (i, 0)),
        input_output_aliases={0: 0},  # donate input buffer; copy elidable in-place
        compiler_params=pltpu.CompilerParams(
            dimension_semantics=("parallel",),
        ),
    )(x2d)
    return jnp.reshape(out2d, x.shape)


if __name__ == "__main__":
    key = jax.random.PRNGKey(0)
    # NCHW input, small shapes: batch=2, channels=4, spatial=16x16
    x = jax.random.normal(key, (2, 4, 16, 16), dtype=jnp.float32)

    y = no_preprocessing(x)
    jax.block_until_ready(y)

    assert y.shape == x.shape, (y.shape, x.shape)
    assert y.dtype == x.dtype, (y.dtype, x.dtype)
    assert bool(jnp.array_equal(y, x)), "identity kernel output mismatch"

    print("KERNEL_OK")
</pallas_src>

<mosaic_0001>
module attributes {stable_mosaic.version = 11 : i64} {
  func.func @_identity_kernel(%arg0: i32, %arg1: memref<1x2048xf32, #tpu.memory_space<vmem>>, %arg2: memref<1x2048xf32, #tpu.memory_space<vmem>>) attributes {dimension_semantics = [#tpu.dimension_semantics<parallel>], iteration_bounds = array<i64: 1>, scalar_prefetch = 0 : i64, scratch_operands = 0 : i64, tpu.core_type = #tpu.core_type<tc>, window_params = [{transform_indices = @transform_0, window_bounds = array<i64: 1, 2048>}, {transform_indices = @transform_1, window_bounds = array<i64: 1, 2048>}]} {
    %c0 = arith.constant 0 : index
    %c0_0 = arith.constant 0 : index
    %0 = vector.load %arg1[%c0, %c0_0] : memref<1x2048xf32, #tpu.memory_space<vmem>>, vector<1x2048xf32>
    %c0_1 = arith.constant 0 : index
    %c0_2 = arith.constant 0 : index
    %1 = vector.load %arg2[%c0_1, %c0_2] : memref<1x2048xf32, #tpu.memory_space<vmem>>, vector<1x2048xf32>
    tpu.vector_store %arg2[%c0_1, %c0_2], %0 {strides = array<i32>} : memref<1x2048xf32, #tpu.memory_space<vmem>>, vector<1x2048xf32>,
    return
  }
  func.func @transform_0(%arg0: i32) -> (i32, i32) {
    %c0_i32 = arith.constant 0 : i32
    %c0_i32_0 = arith.constant 0 : i32
    return %arg0, %c0_i32 : i32, i32
  }
  func.func @transform_1(%arg0: i32) -> (i32, i32) {
    %c0_i32 = arith.constant 0 : i32
    %c0_i32_0 = arith.constant 0 : i32
    return %arg0, %c0_i32 : i32, i32
  }
}

</mosaic_0001>

<llo_original>
// kernel: tpu_custom_call.1
$region0: #{tpu_custom_call.1}
  #allocation0 [shape = 'u32[]', space=smem, size = 0x4, offset = 0x4, fixed_abs, tag = 'smem constant byte address 0x4 - core index']
  #allocation1 [shape = 'u32[144,128]{1,0:T(1,128)}', space=vmem, size = 0x12000, scoped, tag = 'internal scratch']
  %s0 = inlined_call_operand.hbm [shape: f32[1,2048], index: 0, kind: input, shape index: {}, may-alias: {0,1}]
  %s1 = inlined_call_operand.hbm [shape: f32[1,2048], index: 1, kind: output, shape index: {}, may-alias: {0,1}]
  %s2 = sld [smem:[#allocation0]]
  $region18: #{tpu_custom_call.1} parent=0
    _
  %s4 = ssub.s32 1, %s2
  %s5 = scalar_select 0, %s4, %s2
  $region1: #{tpu_custom_call.1} parent=0
    #allocation2 [shape = 'u8[8192]{0}', space=vmem, size = 0x2000, scoped, tag = 'input window, operand 0, single buffered']
    #allocation3 [shape = 's32[1]{0}', space=sflag, size = 0x4, scoped, tag = 'scoped memory for tpu_custom_call.1']
    #allocation4 [shape = 's32[1]{0}', space=sflag, size = 0x4, scoped, tag = 'scoped memory for tpu_custom_call.1']
    #allocation5 [shape = 'u8[8192]{0}', space=vmem, size = 0x2000, scoped, tag = 'output window, operand 0, single buffered']
    %6 = vsyncpa [#allocation3], 0
    %7 = vsyncpa [#allocation4], 0
    // Predicated region
    $region2: #{tpu_custom_call.1} parent=1 // pred_check
      _
    $region3: #{tpu_custom_call.1} parent=1 // pred_check_branch
      %9 = sbr.rel (0) target = $region5
    $region4: #{tpu_custom_call.1} parent=1 // pred_region
      %s11 = ssub.s32 256, 256
      %12 = vsyncadd [#allocation3], %s11
      %s14 = sshll.u32 [#allocation2], 4
      %s15 = int_to_ptr.vmem [resolvable:$true] %s14
      %17 = dma.hbm_to_vmem [thread:$0]  %s0, 256, %s15, [#allocation3]
    $region5: #{tpu_custom_call.1} parent=1 // pred_fallthru
      _
    // Predicated region
    $region6: #{tpu_custom_call.1} parent=1 // pred_check
      _
    $region7: #{tpu_custom_call.1} parent=1 // pred_check_branch
      %19 = sbr.rel (0) target = $region9
    $region8: #{tpu_custom_call.1} parent=1 // pred_region
      %20 = dma.done [#allocation3], 256
    $region9: #{tpu_custom_call.1} parent=1 // pred_fallthru
      _
    %v21 = vld [vmem:[#allocation2] sm:$0xff]
    %v22 = vld [vmem:[#allocation2 + $0x8] sm:$0xff]
    %23 = vst [vmem:[#allocation5] sm:$0xff] %v21
    %24 = vst [vmem:[#allocation5 + $0x8] sm:$0xff] %v22
    // Predicated region
    $region10: #{tpu_custom_call.1} parent=1 // pred_check
      _
    $region11: #{tpu_custom_call.1} parent=1 // pred_check_branch
      %26 = sbr.rel (0) target = $region13
    $region12: #{tpu_custom_call.1} parent=1 // pred_region
      %s28 = ssub.s32 256, 256
      %29 = vsyncadd [#allocation4], %s28
      %s31 = sshll.u32 [#allocation5], 4
      %s32 = int_to_ptr.vmem [resolvable:$true] %s31
      %34 = dma.vmem_to_hbm [thread:$0]  %s32, 256, %s1, [#allocation4]
    $region13: #{tpu_custom_call.1} parent=1 // pred_fallthru
      _
    // Predicated region
    $region14: #{tpu_custom_call.1} parent=1 // pred_check
      _
    $region15: #{tpu_custom_call.1} parent=1 // pred_check_branch
      %36 = sbr.rel (0) target = $region17
    $region16: #{tpu_custom_call.1} parent=1 // pred_region
      %37 = dma.done [#allocation4], 256
    $region17: #{tpu_custom_call.1} parent=1 // pred_fallthru
      _
    %38 = vsyncpa [#allocation3], 1
    %39 = vsyncpa [#allocation4], 1

</llo_original>
